<compile_context>
chip_gen: v6e
topology: v6e:2x2x1
jax: 0.10.0
libtpu: 0.0.40
codegen_flags: <defaults>
</compile_context>

<pallas_src>
import jax
import jax.numpy as jnp
from jax.experimental import pallas as pl
from jax.experimental.pallas import tpu as pltpu


def _swiglu_kernel(x_ref, w1t_ref, w3t_ref, w2t_ref, o_ref, acc_ref):
    # x_ref:   (tm, d_in)      row tile of the (flattened) input
    # w1t_ref: (d_in, th)      slice of w1.T  (columns = hidden block)
    # w3t_ref: (d_in, th)      slice of w3.T
    # w2t_ref: (th, d_in)      slice of w2.T  (rows = hidden block)
    # o_ref:   (tm, d_in)      output tile (resident across the hidden axis)
    # acc_ref: (tm, d_in) f32  accumulator scratch
    h = pl.program_id(1)

    @pl.when(h == 0)
    def _init():
        acc_ref[...] = jnp.zeros_like(acc_ref)

    x = x_ref[...]
    a = jnp.dot(x, w1t_ref[...], preferred_element_type=jnp.float32)   # (tm, th)
    b = jnp.dot(x, w3t_ref[...], preferred_element_type=jnp.float32)   # (tm, th)
    # SiLU exactly as the PyTorch module: a / (1 + exp(-a)); exp runs on the EUP.
    gated = (a / (1.0 + jnp.exp(-a))) * b
    # Second matmul contracts the hidden block; accumulate in f32.
    acc_ref[...] += jnp.dot(gated.astype(x_ref.dtype), w2t_ref[...],
                            preferred_element_type=jnp.float32)

    @pl.when(h == pl.num_programs(1) - 1)
    def _finalize():
        o_ref[...] = acc_ref[...].astype(o_ref.dtype)


def _round_up(a: int, b: int) -> int:
    return (a + b - 1) // b * b


def _pick_tiles(rows: int, d_in: int, d_hid: int, itemsize: int, budget: int):
    """Choose (row_tile, hidden_tile) that respect (8,128) layout rules and fit VMEM."""
    # Hidden tile: must be a multiple of 128 (it is the lane axis of the
    # w1t/w3t blocks) or equal to the full hidden dim.
    th = d_hid
    if d_hid % 128 == 0:
        for cand in (512, 384, 256, 128):
            if d_hid % cand == 0:
                th = cand
                break

    # VMEM that does not scale with the row tile: three weight blocks,
    # double-buffered by the pipeline.
    weight_bytes = 2 * 3 * d_in * th * itemsize
    # Per-row bytes: x block + out block (double-buffered), f32 accumulator,
    # plus the f32 intermediates (a, b, gated) of width th.
    per_row = 2 * 2 * d_in * itemsize + 4 * d_in + 3 * 4 * th
    avail = max(budget - weight_bytes, 64 * per_row)

    tm = min(1024, (avail // per_row) // 8 * 8, _round_up(rows, 8))
    tm = max(8, (tm // 8) * 8)
    return tm, th


def swiglu(x: jax.Array, w1: jax.Array, w2: jax.Array, w3: jax.Array,
           *, vmem_budget_bytes: int = 32 * 1024 * 1024) -> jax.Array:
    """out = (silu(x @ w1.T) * (x @ w3.T)) @ w2.T, matching the PyTorch module."""
    in_dtype = x.dtype
    d_in = x.shape[-1]              # == d_ff in the module's naming
    d_hid, d_in_w = w1.shape        # w1: (d_model, d_ff)
    assert d_in_w == d_in
    assert w3.shape == (d_hid, d_in)
    assert w2.shape == (d_in, d_hid)

    # Present plain-NN operand layouts to the MXU (layout plumbing in wrapper).
    w1t = w1.T                      # (d_in, d_hid)
    w3t = w3.T                      # (d_in, d_hid)
    w2t = w2.T                      # (d_hid, d_in)

    lead = x.shape[:-1]
    rows = 1
    for s in lead:
        rows *= s
    x2d = x.reshape(rows, d_in)

    tm, th = _pick_tiles(rows, d_in, d_hid, jnp.dtype(in_dtype).itemsize,
                         vmem_budget_bytes)

    # Pad rows to a multiple of the row tile instead of collapsing the grid.
    padded_rows = _round_up(rows, tm)
    if padded_rows != rows:
        x2d = jnp.pad(x2d, ((0, padded_rows - rows), (0, 0)))

    grid = (padded_rows // tm, d_hid // th)

    out = pl.pallas_call(
        _swiglu_kernel,
        out_shape=jax.ShapeDtypeStruct((padded_rows, d_in), in_dtype),
        grid_spec=pltpu.PrefetchScalarGridSpec(
            num_scalar_prefetch=0,
            grid=grid,
            in_specs=[
                pl.BlockSpec((tm, d_in), lambda m, h: (m, 0)),   # x rows
                pl.BlockSpec((d_in, th), lambda m, h: (0, h)),   # w1.T cols
                pl.BlockSpec((d_in, th), lambda m, h: (0, h)),   # w3.T cols
                pl.BlockSpec((th, d_in), lambda m, h: (h, 0)),   # w2.T rows
            ],
            out_specs=pl.BlockSpec((tm, d_in), lambda m, h: (m, 0)),
            scratch_shapes=[pltpu.VMEM((tm, d_in), jnp.float32)],
        ),
        compiler_params=pltpu.CompilerParams(
            # rows are independent (megacore-shardable); hidden axis is a reduction.
            dimension_semantics=("parallel", "arbitrary"),
            # Raise the scoped VMEM limit so the large tiles actually fit; the
            # tile heuristic budgets ~32 MiB so this is safe on v5e/v6e/v7x.
            vmem_limit_bytes=48 * 1024 * 1024,
        ),
    )(x2d, w1t, w3t, w2t)

    if padded_rows != rows:
        out = out[:rows]
    return out.reshape(*lead, d_in)


def swiglu_ref(x, w1, w2, w3):
    a = x @ w1.T
    b = x @ w3.T
    return (a / (1.0 + jnp.exp(-a)) * b) @ w2.T


if __name__ == "__main__":
    key = jax.random.PRNGKey(0)
    k_x, k1, k2, k3 = jax.random.split(key, 4)

    batch, seq, d_model, d_ff = 2, 8, 32, 64
    # Input feature dim is d_ff (the module multiplies by w1.T where w1 is (d_model, d_ff)).
    x = jax.random.normal(k_x, (batch, seq, d_ff), dtype=jnp.float32)

    # Parameter init matches PyTorch __init__: trunc_normal_ (std 1, clipped to [-2, 2]).
    w1 = jax.random.truncated_normal(k1, -2.0, 2.0, (d_model, d_ff), dtype=jnp.float32)
    w2 = jax.random.truncated_normal(k2, -2.0, 2.0, (d_ff, d_model), dtype=jnp.float32)
    w3 = jax.random.truncated_normal(k3, -2.0, 2.0, (d_model, d_ff), dtype=jnp.float32)

    out = swiglu(x, w1, w2, w3)
    out = jax.block_until_ready(out)

    ref = swiglu_ref(x, w1, w2, w3)
    assert out.shape == (batch, seq, d_ff) and out.dtype == x.dtype
    rel_err = jnp.max(jnp.abs(out - ref)) / (jnp.max(jnp.abs(ref)) + 1e-6)
    assert float(rel_err) < 2e-2, f"relative error too large: {float(rel_err)}"

    print("KERNEL_OK")
</pallas_src>

<mosaic_0001>
module attributes {stable_mosaic.version = 11 : i64} {
  func.func @_swiglu_kernel(%arg0: i32, %arg1: i32, %arg2: memref<16x64xf32, #tpu.memory_space<vmem>>, %arg3: memref<64x32xf32, #tpu.memory_space<vmem>>, %arg4: memref<64x32xf32, #tpu.memory_space<vmem>>, %arg5: memref<32x64xf32, #tpu.memory_space<vmem>>, %arg6: memref<16x64xf32, #tpu.memory_space<vmem>>, %arg7: memref<16x64xf32, #tpu.memory_space<vmem>>) attributes {dimension_semantics = [#tpu.dimension_semantics<parallel>, #tpu.dimension_semantics<arbitrary>], iteration_bounds = array<i64: 1, 1>, scalar_prefetch = 0 : i64, scratch_operands = 1 : i64, tpu.core_type = #tpu.core_type<tc>, window_params = [{transform_indices = @transform_0, window_bounds = array<i64: 16, 64>}, {transform_indices = @transform_1, window_bounds = array<i64: 64, 32>}, {transform_indices = @transform_2, window_bounds = array<i64: 64, 32>}, {transform_indices = @transform_3, window_bounds = array<i64: 32, 64>}, {transform_indices = @transform_4, window_bounds = array<i64: 16, 64>}]} {
    %c0_i32 = arith.constant 0 : i32
    %0 = arith.cmpi eq, %arg1, %c0_i32 : i32
    %1 = arith.extui %0 : i1 to i32
    %c0_i32_0 = arith.constant 0 : i32
    %2 = arith.cmpi ne, %1, %c0_i32_0 : i32
    scf.if %2 {
      %cst_18 = arith.constant 0.000000e+00 : f32
      %23 = vector.broadcast %cst_18 : f32 to vector<16x64xf32>
      %c0_19 = arith.constant 0 : index
      %c0_20 = arith.constant 0 : index
      %24 = vector.load %arg7[%c0_19, %c0_20] : memref<16x64xf32, #tpu.memory_space<vmem>>, vector<16x64xf32>
      tpu.vector_store %arg7[%c0_19, %c0_20], %23 {strides = array<i32>} : memref<16x64xf32, #tpu.memory_space<vmem>>, vector<16x64xf32>,
    } else {
    }
    %c0 = arith.constant 0 : index
    %c0_1 = arith.constant 0 : index
    %3 = vector.load %arg2[%c0, %c0_1] : memref<16x64xf32, #tpu.memory_space<vmem>>, vector<16x64xf32>
    %c0_2 = arith.constant 0 : index
    %c0_3 = arith.constant 0 : index
    %4 = vector.load %arg3[%c0_2, %c0_3] : memref<64x32xf32, #tpu.memory_space<vmem>>, vector<64x32xf32>
    %cst = arith.constant dense<0.000000e+00> : vector<16x32xf32>
    %5 = tpu.matmul %3, %4, %cst {dimension_numbers = #tpu.dot_dimension_numbers<[1], [0], [0], [1], [0, 0, 1, 1], [], []>} : vector<16x64xf32>, vector<64x32xf32>, vector<16x32xf32> -> vector<16x32xf32>
    %c0_4 = arith.constant 0 : index
    %c0_5 = arith.constant 0 : index
    %6 = vector.load %arg4[%c0_4, %c0_5] : memref<64x32xf32, #tpu.memory_space<vmem>>, vector<64x32xf32>
    %cst_6 = arith.constant dense<0.000000e+00> : vector<16x32xf32>
    %7 = tpu.matmul %3, %6, %cst_6 {dimension_numbers = #tpu.dot_dimension_numbers<[1], [0], [0], [1], [0, 0, 1, 1], [], []>} : vector<16x64xf32>, vector<64x32xf32>, vector<16x32xf32> -> vector<16x32xf32>
    %cst_7 = arith.constant 0.000000e+00 : f32
    %8 = vector.broadcast %cst_7 : f32 to vector<16x32xf32>
    %9 = arith.subf %8, %5 : vector<16x32xf32>
    %10 = math.exp %9 : vector<16x32xf32>
    %cst_8 = arith.constant 1.000000e+00 : f32
    %11 = vector.broadcast %cst_8 : f32 to vector<16x32xf32>
    %12 = arith.addf %11, %10 : vector<16x32xf32>
    %13 = arith.divf %5, %12 : vector<16x32xf32>
    %14 = arith.mulf %13, %7 : vector<16x32xf32>
    %c0_9 = arith.constant 0 : index
    %c0_10 = arith.constant 0 : index
    %15 = vector.load %arg7[%c0_9, %c0_10] : memref<16x64xf32, #tpu.memory_space<vmem>>, vector<16x64xf32>
    %c0_11 = arith.constant 0 : index
    %c0_12 = arith.constant 0 : index
    %16 = vector.load %arg5[%c0_11, %c0_12] : memref<32x64xf32, #tpu.memory_space<vmem>>, vector<32x64xf32>
    %cst_13 = arith.constant dense<0.000000e+00> : vector<16x64xf32>
    %17 = tpu.matmul %14, %16, %cst_13 {dimension_numbers = #tpu.dot_dimension_numbers<[1], [0], [0], [1], [0, 0, 1, 1], [], []>} : vector<16x32xf32>, vector<32x64xf32>, vector<16x64xf32> -> vector<16x64xf32>
    %18 = arith.addf %15, %17 : vector<16x64xf32>
    %c0_14 = arith.constant 0 : index
    %c0_15 = arith.constant 0 : index
    %19 = vector.load %arg7[%c0_14, %c0_15] : memref<16x64xf32, #tpu.memory_space<vmem>>, vector<16x64xf32>
    tpu.vector_store %arg7[%c0_14, %c0_15], %18 {strides = array<i32>} : memref<16x64xf32, #tpu.memory_space<vmem>>, vector<16x64xf32>,
    %c0_i32_16 = arith.constant 0 : i32
    %20 = arith.cmpi eq, %arg1, %c0_i32_16 : i32
    %21 = arith.extui %20 : i1 to i32
    %c0_i32_17 = arith.constant 0 : i32
    %22 = arith.cmpi ne, %21, %c0_i32_17 : i32
    scf.if %22 {
      %c0_18 = arith.constant 0 : index
      %c0_19 = arith.constant 0 : index
      %23 = vector.load %arg7[%c0_18, %c0_19] : memref<16x64xf32, #tpu.memory_space<vmem>>, vector<16x64xf32>
      %c0_20 = arith.constant 0 : index
      %c0_21 = arith.constant 0 : index
      %24 = vector.load %arg6[%c0_20, %c0_21] : memref<16x64xf32, #tpu.memory_space<vmem>>, vector<16x64xf32>
      tpu.vector_store %arg6[%c0_20, %c0_21], %23 {strides = array<i32>} : memref<16x64xf32, #tpu.memory_space<vmem>>, vector<16x64xf32>,
    } else {
    }
    return
  }
  func.func @transform_0(%arg0: i32, %arg1: i32) -> (i32, i32) {
    %c0_i32 = arith.constant 0 : i32
    %c0_i32_0 = arith.constant 0 : i32
    return %arg0, %c0_i32 : i32, i32
  }
  func.func @transform_1(%arg0: i32, %arg1: i32) -> (i32, i32) {
    %c0_i32 = arith.constant 0 : i32
    %c0_i32_0 = arith.constant 0 : i32
    return %c0_i32, %arg1 : i32, i32
  }
  func.func @transform_2(%arg0: i32, %arg1: i32) -> (i32, i32) {
    %c0_i32 = arith.constant 0 : i32
    %c0_i32_0 = arith.constant 0 : i32
    return %c0_i32, %arg1 : i32, i32
  }
  func.func @transform_3(%arg0: i32, %arg1: i32) -> (i32, i32) {
    %c0_i32 = arith.constant 0 : i32
    %c0_i32_0 = arith.constant 0 : i32
    return %arg1, %c0_i32 : i32, i32
  }
  func.func @transform_4(%arg0: i32, %arg1: i32) -> (i32, i32) {
    %c0_i32 = arith.constant 0 : i32
    %c0_i32_0 = arith.constant 0 : i32
    return %arg0, %c0_i32 : i32, i32
  }
}

</mosaic_0001>

<llo_original>
// kernel: tpu_custom_call.1
$region0: #{tpu_custom_call.1}
  #allocation0 [shape = 'u32[]', space=smem, size = 0x4, offset = 0x4, fixed_abs, tag = 'smem constant byte address 0x4 - core index']
  #allocation1 [shape = 'u32[144,128]{1,0:T(1,128)}', space=vmem, size = 0x12000, scoped, tag = 'internal scratch']
  #allocation2 [shape = 'f32[16,64]{1,0:T(8,128)}', space=vmem, size = 0x2000, scoped, tag = 'scratch operand']
  %s0 = inlined_call_operand.vmem [shape: f32[16,64], index: 0, kind: input, shape index: {}]
  %s1 = inlined_call_operand.vmem [shape: f32[64,32], index: 1, kind: input, shape index: {}]
  %s2 = inlined_call_operand.vmem [shape: f32[64,32], index: 2, kind: input, shape index: {}]
  %s3 = inlined_call_operand.vmem [shape: f32[32,64], index: 3, kind: input, shape index: {}]
  %s4 = inlined_call_operand.hbm [shape: f32[16,64], index: 4, kind: output, shape index: {}]
  %s5 = sld [smem:[#allocation0]]
  $region34: #{tpu_custom_call.1} parent=0
    _
  %s7 = ssub.s32 1, %s5
  %s8 = scalar_select 0, %s7, %s5
  $region1: #{tpu_custom_call.1} parent=0
    #allocation3 [shape = 'u8[8192]{0}', space=vmem, size = 0x2000, scoped, tag = 'output window, operand 0, single buffered']
    #allocation4 [shape = 's32[1]{0}', space=sflag, size = 0x4, scoped, tag = 'scoped memory for tpu_custom_call.1']
    %9 = vsyncpa [#allocation4], 0
    // Predicated region
    $region2: #{tpu_custom_call.1} parent=1 // pred_check
      _
    $region3: #{tpu_custom_call.1} parent=1 // pred_check_branch
      %11 = sbr.rel (0) target = $region5
    $region4: #{tpu_custom_call.1} parent=1 // pred_region
      _
    $region5: #{tpu_custom_call.1} parent=1 // pred_fallthru
      _
    // Predicated region
    $region6: #{tpu_custom_call.1} parent=1 // pred_check
      _
    $region7: #{tpu_custom_call.1} parent=1 // pred_check_branch
      %13 = sbr.rel (0) target = $region9
    $region8: #{tpu_custom_call.1} parent=1 // pred_region
      _
    $region9: #{tpu_custom_call.1} parent=1 // pred_fallthru
      _
    // Predicated region
    $region10: #{tpu_custom_call.1} parent=1 // pred_check
      _
    $region11: #{tpu_custom_call.1} parent=1 // pred_check_branch
      %15 = sbr.rel (0) target = $region13
    $region12: #{tpu_custom_call.1} parent=1 // pred_region
      _
    $region13: #{tpu_custom_call.1} parent=1 // pred_fallthru
      _
    // Predicated region
    $region14: #{tpu_custom_call.1} parent=1 // pred_check
      _
    $region15: #{tpu_custom_call.1} parent=1 // pred_check_branch
      %17 = sbr.rel (0) target = $region17
    $region16: #{tpu_custom_call.1} parent=1 // pred_region
      _
    $region17: #{tpu_custom_call.1} parent=1 // pred_fallthru
      _
    %p18 = scmp.eq.s32.totalorder 0, 0
    // Predicated region
    $region18: #{tpu_custom_call.1} parent=1 // pred_check
      %p19 = pneg %p18
    $region19: #{tpu_custom_call.1} parent=1 // pred_check_branch
      %21 = sbr.rel (%p19) target = $region21
    $region20: #{tpu_custom_call.1} parent=1 // pred_region
      %vm22 = vcmask 523264
      %23 = vst.msk [vmem:[#allocation2] sm:$0xff] %vm22, 0.0
      %24 = vst.msk [vmem:[#allocation2 + $0x8] sm:$0xff] %vm22, 0.0
    $region21: #{tpu_custom_call.1} parent=1 // pred_fallthru
      _
    %v25 = vld [vmem:[%s0] sm:$0xff]
    %v26 = vld [vmem:[%s0 + $0x8] sm:$0xff]
    %v27 = vld [vmem:[%s1] sm:$0xff]
    %v28 = vld [vmem:[%s1 + $0x8] sm:$0xff]
    %v29 = vld [vmem:[%s1 + $0x10] sm:$0xff]
    %v30 = vld [vmem:[%s1 + $0x18] sm:$0xff]
    %v31 = vld [vmem:[%s1 + $0x20] sm:$0xff]
    %v32 = vld [vmem:[%s1 + $0x28] sm:$0xff]
    %v33 = vld [vmem:[%s1 + $0x30] sm:$0xff]
    %v34 = vld [vmem:[%s1 + $0x38] sm:$0xff]
    %vm35 = vcmask 523264
    %v37 = vsel %vm35, %v25, 0
    %v40 = vsel %vm35, %v26, 0
    %42 = vmatprep.subr.mxu0 0.0
    %43 = vmatpush1.msra.mxu0 0.0
    %44 = vmatprep.subr.mxu0 0.0
    %45 = vmatpush1.msra.mxu0 0.0
    %46 = vmatprep.subr.mxu0 0.0
    %47 = vmatpush1.msra.mxu0 0.0
    %48 = vmatprep.subr.mxu0 0.0
    %49 = vmatpush1.msra.mxu0 0.0
    %50 = vmatprep.subr.mxu0 0.0
    %51 = vmatpush1.msra.mxu0 0.0
    %52 = vmatprep.subr.mxu0 0.0
    %53 = vmatpush1.msra.mxu0 0.0
    %54 = vmatprep.subr.mxu0 0.0
    %55 = vmatpush1.msra.mxu0 0.0
    %56 = vmatprep.subr.mxu0 0.0
    %57 = vmatpush1.msra.mxu0 0.0
    %58 = vmatprep.subr.mxu0 0.0
    %59 = vmatpush1.msra.mxu0 %v34
    %60 = vmatprep.subr.mxu0 0.0
    %61 = vmatpush1.msra.mxu0 %v33
    %62 = vmatprep.subr.mxu0 0.0
    %63 = vmatpush1.msra.mxu0 %v32
    %64 = vmatprep.subr.mxu0 0.0
    %65 = vmatpush1.msra.mxu0 %v31
    %66 = vmatprep.subr.mxu0 0.0
    %67 = vmatpush1.msra.mxu0 %v30
    %68 = vmatprep.subr.mxu0 0.0
    %69 = vmatpush1.msra.mxu0 %v29
    %70 = vmatprep.subr.mxu0 0.0
    %71 = vmatpush1.msra.mxu0 %v28
    %72 = vmatprep.subr.mxu0 0.0
    %73 = vmatpush1.msra.mxu0 %v27
    %74 = vmatprep.subr.mxu0 0.0
    %75 = vmatpush2.msra.mxu0 0.0
    %76 = vmatprep.subr.mxu0 0.0
    %77 = vmatpush2.msra.mxu0 0.0
    %78 = vmatprep.subr.mxu0 0.0
    %79 = vmatpush2.msra.mxu0 0.0
    %80 = vmatprep.subr.mxu0 0.0
    %81 = vmatpush2.msra.mxu0 0.0
    %82 = vmatprep.subr.mxu0 0.0
    %83 = vmatpush2.msra.mxu0 0.0
    %84 = vmatprep.subr.mxu0 0.0
    %85 = vmatpush2.msra.mxu0 0.0
    %86 = vmatprep.subr.mxu0 0.0
    %87 = vmatpush2.msra.mxu0 0.0
    %88 = vmatprep.subr.mxu0 0.0
    %89 = vmatpush2.msra.mxu0 0.0
    %90 = vmatprep.subr.mxu0 0.0
    %91 = vmatpush2.msra.mxu0 0.0
    %92 = vmatprep.subr.mxu0 0.0
    %93 = vmatpush2.msra.mxu0 0.0
    %94 = vmatprep.subr.mxu0 0.0
    %95 = vmatpush2.msra.mxu0 0.0
    %96 = vmatprep.subr.mxu0 0.0
    %97 = vmatpush2.msra.mxu0 0.0
    %98 = vmatprep.subr.mxu0 0.0
    %99 = vmatpush2.msra.mxu0 0.0
    %100 = vmatprep.subr.mxu0 0.0
    %101 = vmatpush2.msra.mxu0 0.0
    %102 = vmatprep.subr.mxu0 0.0
    %103 = vmatpush2.msra.mxu0 0.0
    %104 = vmatprep.subr.mxu0 0.0
    %105 = vmatpush2.msra.mxu0 0.0
    %106 = vmatprep.mubr.f32.mxu0 0.0
    %107 = vmatmul.mubr.f32.gmra.mxu0 %v37
    %v108 = vpop.f32.mrf.mxu0
    %v109 = vadd.f32 0.0, %v108
    %v110 = vpop.f32.mrf.mxu0
    %111 = vmatprep.mubr.f32.mxu0 0.0
    %112 = vmatmul.mubr.f32.gmra.mxu0 %v40
    %v113 = vpop.f32.mrf.mxu0
    %v114 = vadd.f32 0.0, %v113
    %v115 = vpop.f32.mrf.mxu0
    %116 = vdwg.mxu0
    %v117 = vld [vmem:[%s2] sm:$0xff]
    %v118 = vld [vmem:[%s2 + $0x8] sm:$0xff]
    %v119 = vld [vmem:[%s2 + $0x10] sm:$0xff]
    %v120 = vld [vmem:[%s2 + $0x18] sm:$0xff]
    %v121 = vld [vmem:[%s2 + $0x20] sm:$0xff]
    %v122 = vld [vmem:[%s2 + $0x28] sm:$0xff]
    %v123 = vld [vmem:[%s2 + $0x30] sm:$0xff]
    %v124 = vld [vmem:[%s2 + $0x38] sm:$0xff]
    %125 = vmatprep.subr.mxu0 0.0
    %126 = vmatpush1.msra.mxu0 0.0
    %127 = vmatprep.subr.mxu0 0.0
    %128 = vmatpush1.msra.mxu0 0.0
    %129 = vmatprep.subr.mxu0 0.0
    %130 = vmatpush1.msra.mxu0 0.0
    %131 = vmatprep.subr.mxu0 0.0
    %132 = vmatpush1.msra.mxu0 0.0
    %133 = vmatprep.subr.mxu0 0.0
    %134 = vmatpush1.msra.mxu0 0.0
    %135 = vmatprep.subr.mxu0 0.0
    %136 = vmatpush1.msra.mxu0 0.0
    %137 = vmatprep.subr.mxu0 0.0
    %138 = vmatpush1.msra.mxu0 0.0
    %139 = vmatprep.subr.mxu0 0.0
    %140 = vmatpush1.msra.mxu0 0.0
    %141 = vmatprep.subr.mxu0 0.0
    %142 = vmatpush1.msra.mxu0 %v124
    %143 = vmatprep.subr.mxu0 0.0
    %144 = vmatpush1.msra.mxu0 %v123
    %145 = vmatprep.subr.mxu0 0.0
    %146 = vmatpush1.msra.mxu0 %v122
    %147 = vmatprep.subr.mxu0 0.0
    %148 = vmatpush1.msra.mxu0 %v121
    %149 = vmatprep.subr.mxu0 0.0
    %150 = vmatpush1.msra.mxu0 %v120
    %151 = vmatprep.subr.mxu0 0.0
    %152 = vmatpush1.msra.mxu0 %v119
    %153 = vmatprep.subr.mxu0 0.0
    %154 = vmatpush1.msra.mxu0 %v118
    %155 = vmatprep.subr.mxu0 0.0
    %156 = vmatpush1.msra.mxu0 %v117
    %157 = vmatprep.subr.mxu0 0.0
    %158 = vmatpush2.msra.mxu0 0.0
    %159 = vmatprep.subr.mxu0 0.0
    %160 = vmatpush2.msra.mxu0 0.0
    %161 = vmatprep.subr.mxu0 0.0
    %162 = vmatpush2.msra.mxu0 0.0
    %163 = vmatprep.subr.mxu0 0.0
    %164 = vmatpush2.msra.mxu0 0.0
    %165 = vmatprep.subr.mxu0 0.0
    %166 = vmatpush2.msra.mxu0 0.0
    %167 = vmatprep.subr.mxu0 0.0
    %168 = vmatpush2.msra.mxu0 0.0
    %169 = vmatprep.subr.mxu0 0.0
    %170 = vmatpush2.msra.mxu0 0.0
    %171 = vmatprep.subr.mxu0 0.0
    %172 = vmatpush2.msra.mxu0 0.0
    %173 = vmatprep.subr.mxu0 0.0
    %174 = vmatpush2.msra.mxu0 0.0
    %175 = vmatprep.subr.mxu0 0.0
    %176 = vmatpush2.msra.mxu0 0.0
    %177 = vmatprep.subr.mxu0 0.0
    %178 = vmatpush2.msra.mxu0 0.0
    %179 = vmatprep.subr.mxu0 0.0
    %180 = vmatpush2.msra.mxu0 0.0
    %181 = vmatprep.subr.mxu0 0.0
    %182 = vmatpush2.msra.mxu0 0.0
    %183 = vmatprep.subr.mxu0 0.0
    %184 = vmatpush2.msra.mxu0 0.0
    %185 = vmatprep.subr.mxu0 0.0
    %186 = vmatpush2.msra.mxu0 0.0
    %187 = vmatprep.subr.mxu0 0.0
    %188 = vmatpush2.msra.mxu0 0.0
    %189 = vmatprep.mubr.f32.mxu0 0.0
    %190 = vmatmul.mubr.f32.gmra.mxu0 %v37
    %v191 = vpop.f32.mrf.mxu0
    %v192 = vadd.f32 0.0, %v191
    %v193 = vpop.f32.mrf.mxu0
    %194 = vmatprep.mubr.f32.mxu0 0.0
    %195 = vmatmul.mubr.f32.gmra.mxu0 %v40
    %v196 = vpop.f32.mrf.mxu0
    %v197 = vadd.f32 0.0, %v196
    %v198 = vpop.f32.mrf.mxu0
    %199 = vdwg.mxu0
    %v200 = vsub.f32 0.0, %v109
    %v201 = vsub.f32 0.0, %v114
    %v202 = vmul.f32 %v200, 1.442695
    %v203 = vpow.pop %v202
    %v204 = vmul.f32 %v201, 1.442695
    %v205 = vpow.pop %v204
    %v206 = vadd.f32 %v203, 1.0
    %v207 = vadd.f32 %v205, 1.0
    %v208 = vrcp.pop %v206
    %v209 = vmul.f32 %v109, %v208
    %v210 = vrcp.pop %v207
    %v211 = vmul.f32 %v114, %v210
    %v212 = vmul.f32 %v209, %v192
    %v213 = vmul.f32 %v211, %v197
    %v214 = vld [vmem:[#allocation2] sm:$0xff]
    %v215 = vld [vmem:[#allocation2 + $0x8] sm:$0xff]
    %v216 = vld [vmem:[%s3] sm:$0xff]
    %v217 = vld [vmem:[%s3 + $0x8] sm:$0xff]
    %v218 = vld [vmem:[%s3 + $0x10] sm:$0xff]
    %v219 = vld [vmem:[%s3 + $0x18] sm:$0xff]
    %vm220 = vcmask 261120
    %v222 = vsel %vm220, %v212, 0
    %v225 = vsel %vm220, %v213, 0
    %227 = vmatprep.subr.mxu0 0.0
    %228 = vmatpush1.msra.mxu0 0.0
    %229 = vmatprep.subr.mxu0 0.0
    %230 = vmatpush1.msra.mxu0 0.0
    %231 = vmatprep.subr.mxu0 0.0
    %232 = vmatpush1.msra.mxu0 0.0
    %233 = vmatprep.subr.mxu0 0.0
    %234 = vmatpush1.msra.mxu0 0.0
    %235 = vmatprep.subr.mxu0 0.0
    %236 = vmatpush1.msra.mxu0 0.0
    %237 = vmatprep.subr.mxu0 0.0
    %238 = vmatpush1.msra.mxu0 0.0
    %239 = vmatprep.subr.mxu0 0.0
    %240 = vmatpush1.msra.mxu0 0.0
    %241 = vmatprep.subr.mxu0 0.0
    %242 = vmatpush1.msra.mxu0 0.0
    %243 = vmatprep.subr.mxu0 0.0
    %244 = vmatpush1.msra.mxu0 0.0
    %245 = vmatprep.subr.mxu0 0.0
    %246 = vmatpush1.msra.mxu0 0.0
    %247 = vmatprep.subr.mxu0 0.0
    %248 = vmatpush1.msra.mxu0 0.0
    %249 = vmatprep.subr.mxu0 0.0
    %250 = vmatpush1.msra.mxu0 0.0
    %251 = vmatprep.subr.mxu0 0.0
    %252 = vmatpush1.msra.mxu0 %v219
    %253 = vmatprep.subr.mxu0 0.0
    %254 = vmatpush1.msra.mxu0 %v218
    %255 = vmatprep.subr.mxu0 0.0
    %256 = vmatpush1.msra.mxu0 %v217
    %257 = vmatprep.subr.mxu0 0.0
    %258 = vmatpush1.msra.mxu0 %v216
    %259 = vmatprep.subr.mxu0 0.0
    %260 = vmatpush2.msra.mxu0 0.0
    %261 = vmatprep.subr.mxu0 0.0
    %262 = vmatpush2.msra.mxu0 0.0
    %263 = vmatprep.subr.mxu0 0.0
    %264 = vmatpush2.msra.mxu0 0.0
    %265 = vmatprep.subr.mxu0 0.0
    %266 = vmatpush2.msra.mxu0 0.0
    %267 = vmatprep.subr.mxu0 0.0
    %268 = vmatpush2.msra.mxu0 0.0
    %269 = vmatprep.subr.mxu0 0.0
    %270 = vmatpush2.msra.mxu0 0.0
    %271 = vmatprep.subr.mxu0 0.0
    %272 = vmatpush2.msra.mxu0 0.0
    %273 = vmatprep.subr.mxu0 0.0
    %274 = vmatpush2.msra.mxu0 0.0
    %275 = vmatprep.subr.mxu0 0.0
    %276 = vmatpush2.msra.mxu0 0.0
    %277 = vmatprep.subr.mxu0 0.0
    %278 = vmatpush2.msra.mxu0 0.0
    %279 = vmatprep.subr.mxu0 0.0
    %280 = vmatpush2.msra.mxu0 0.0
    %281 = vmatprep.subr.mxu0 0.0
    %282 = vmatpush2.msra.mxu0 0.0
    %283 = vmatprep.subr.mxu0 0.0
    %284 = vmatpush2.msra.mxu0 0.0
    %285 = vmatprep.subr.mxu0 0.0
    %286 = vmatpush2.msra.mxu0 0.0
    %287 = vmatprep.subr.mxu0 0.0
    %288 = vmatpush2.msra.mxu0 0.0
    %289 = vmatprep.subr.mxu0 0.0
    %290 = vmatpush2.msra.mxu0 0.0
    %291 = vmatprep.mubr.f32.mxu0 0.0
    %292 = vmatmul.mubr.f32.gmra.mxu0 %v222
    %v293 = vpop.f32.mrf.mxu0
    %v294 = vadd.f32 0.0, %v293
    %v295 = vpop.f32.mrf.mxu0
    %296 = vmatprep.mubr.f32.mxu0 0.0
    %297 = vmatmul.mubr.f32.gmra.mxu0 %v225
    %v298 = vpop.f32.mrf.mxu0
    %v299 = vadd.f32 0.0, %v298
    %v300 = vpop.f32.mrf.mxu0
    %301 = vdwg.mxu0
    %v302 = vadd.f32 %v214, %v294
    %v303 = vadd.f32 %v215, %v299
    %304 = vst.msk [vmem:[#allocation2] sm:$0xff] %vm35, %v302
    %305 = vst.msk [vmem:[#allocation2 + $0x8] sm:$0xff] %vm35, %v303
    // Predicated region
    $region22: #{tpu_custom_call.1} parent=1 // pred_check
      %p306 = pneg %p18
    $region23: #{tpu_custom_call.1} parent=1 // pred_check_branch
      %308 = sbr.rel (%p306) target = $region25
    $region24: #{tpu_custom_call.1} parent=1 // pred_region
      %v309 = vld [vmem:[#allocation2] sm:$0xff]
      %v310 = vld [vmem:[#allocation2 + $0x8] sm:$0xff]
      %311 = vst.msk [vmem:[#allocation3] sm:$0xff] %vm35, %v309
      %312 = vst.msk [vmem:[#allocation3 + $0x8] sm:$0xff] %vm35, %v310
    $region25: #{tpu_custom_call.1} parent=1 // pred_fallthru
      _
    // Predicated region
    $region26: #{tpu_custom_call.1} parent=1 // pred_check
      _
    $region27: #{tpu_custom_call.1} parent=1 // pred_check_branch
      %314 = sbr.rel (0) target = $region29
    $region28: #{tpu_custom_call.1} parent=1 // pred_region
      %s316 = ssub.s32 256, 256
      %317 = vsyncadd [#allocation4], %s316
      %s318 = sshll.u32 [#allocation3], 4
      %s319 = int_to_ptr.vmem [resolvable:$true] %s318
      %324 = dma.vmem_to_hbm [thread:$0]  %s319, 256, %s4, [#allocation4], 128, 128, 8
    $region29: #{tpu_custom_call.1} parent=1 // pred_fallthru
      _
    // Predicated region
    $region30: #{tpu_custom_call.1} parent=1 // pred_check
      _
    $region31: #{tpu_custom_call.1} parent=1 // pred_check_branch
      %326 = sbr.rel (0) target = $region33
    $region32: #{tpu_custom_call.1} parent=1 // pred_region
      %327 = dma.done [#allocation4], 256
    $region33: #{tpu_custom_call.1} parent=1 // pred_fallthru
      _
    %328 = vsyncpa [#allocation4], 1

</llo_original>
